<compile_context>
chip_gen: v7x
topology: tpu7x:2x2x1
jax: 0.10.0
libtpu: 0.0.40
codegen_flags: <defaults>
</compile_context>

<pallas_src>
import math

import jax
import jax.numpy as jnp
from jax.experimental import pallas as pl
from jax.experimental.pallas import tpu as pltpu

IN_FEATURES = 1664          # 13 * 128 -> lane aligned
HIDDEN = 512
OUT_FEATURES = 1
LANES = 128                 # lane-dense output width; column 0 holds the result
TM_MAX_FAITHFUL = 512       # bf16 x tile: 512*1664*2B = 1.6 MiB per buffer
TM_MAX_FUSED = 1024         # f32 x tile: 1024*1664*4B = 6.8 MiB per buffer (mem-bound path)
VMEM_LIMIT_BYTES = 32 * 1024 * 1024   # safe on v5e/v6e/v7x; fused worst case ~15 MiB


def _round_up(n, m):
    return ((n + m - 1) // m) * m


def _tiling(batch, tm_max, align):
    """Batch tiling: tm % align == 0, minimal padding, and >=2 grid steps when
    there is enough work (so v7x can shard the 'parallel' batch axis)."""
    tm_max = max(align, (tm_max // align) * align)      # hard-enforce alignment
    min_tiles = 2 if batch >= 16 else 1
    num_tiles = max(pl.cdiv(max(batch, 1), tm_max), min_tiles)
    tm = min(tm_max, _round_up(pl.cdiv(max(batch, 1), num_tiles), align))
    b_pad = num_tiles * tm
    return tm, num_tiles, b_pad


# ----------------------------------------------------------------------------
# Faithful two-layer kernel: fc1 on the MXU (bf16 operands, f32 accumulate),
# fc_end (N=1) as a VPU/XLU lane reduction against a (1,512) f32 row.
# ----------------------------------------------------------------------------
def fcnet_kernel(x_ref, w1_ref, b1_ref, w2_ref, b2_ref, o_ref):
    # x_ref: (tm, 1664) bf16   w1_ref: (1664, 512) bf16
    # b1_ref: (1, 512) f32     w2_ref: (1, 512) f32     b2_ref: (1,) f32 in SMEM
    # o_ref: (tm, 128) f32
    h = jnp.dot(x_ref[...], w1_ref[...], preferred_element_type=jnp.float32)
    h = h + b1_ref[...]
    # fc_end has N=1: a lane reduction beats a 1-column MXU matmul.
    out = jnp.sum(h * w2_ref[...], axis=-1, keepdims=True) + b2_ref[0]   # (tm, 1)
    # Lane-dense store: broadcast the per-row scalar across 128 lanes; the
    # wrapper slices column 0.  Avoids masked 1/128-lane vst.msk writes.
    o_ref[...] = jnp.broadcast_to(out, o_ref.shape).astype(o_ref.dtype)


def fcnet_forward(x, params, tm_max=TM_MAX_FAITHFUL):
    """Faithful two-layer forward.  params = (fc1_w, fc1_b, fc2_w, fc2_b) in PyTorch layout.
    bf16 MXU operands -> ~1e-2 relative accuracy vs a pure-f32 reference."""
    fc1_w, fc1_b, fc2_w, fc2_b = params
    B = x.shape[0]
    tm, num_tiles, b_pad = _tiling(B, tm_max, align=16)   # 16: bf16 sublane packing

    xb = x.astype(jnp.bfloat16)
    if b_pad != B:
        xb = jnp.pad(xb, ((0, b_pad - B), (0, 0)))

    w1t = fc1_w.T.astype(jnp.bfloat16)                    # (1664, 512) MXU-friendly layout
    b1 = fc1_b.reshape(1, HIDDEN).astype(jnp.float32)
    w2 = fc2_w.reshape(1, HIDDEN).astype(jnp.float32)
    b2 = fc2_b.reshape(1).astype(jnp.float32)

    out = pl.pallas_call(
        fcnet_kernel,
        out_shape=jax.ShapeDtypeStruct((b_pad, LANES), jnp.float32),
        grid_spec=pltpu.PrefetchScalarGridSpec(
            num_scalar_prefetch=0,
            grid=(num_tiles,),
            in_specs=[
                # x: tiled over batch (double-buffered by default).
                pl.BlockSpec((tm, IN_FEATURES), lambda i: (i, 0)),
                # Grid-invariant operands: single VMEM buffer is enough.
                pl.BlockSpec((IN_FEATURES, HIDDEN), lambda i: (0, 0),
                             pipeline_mode=pl.Buffered(1)),
                pl.BlockSpec((1, HIDDEN), lambda i: (0, 0),
                             pipeline_mode=pl.Buffered(1)),
                pl.BlockSpec((1, HIDDEN), lambda i: (0, 0),
                             pipeline_mode=pl.Buffered(1)),
                # b2: a single scalar -> SMEM, not a padded (8,128) VMEM tile.
                pl.BlockSpec(memory_space=pltpu.MemorySpace.SMEM),
            ],
            out_specs=pl.BlockSpec((tm, LANES), lambda i: (i, 0)),
        ),
        compiler_params=pltpu.CompilerParams(
            # Batch axis is independent -> shard across v7x's two TensorCores.
            dimension_semantics=("parallel",),
            vmem_limit_bytes=VMEM_LIMIT_BYTES,
        ),
        cost_estimate=pl.CostEstimate(
            flops=2 * b_pad * IN_FEATURES * HIDDEN + 3 * b_pad * HIDDEN,
            transcendentals=0,
            bytes_accessed=(2 * b_pad * IN_FEATURES          # bf16 x stream
                            + 2 * IN_FEATURES * HIDDEN       # bf16 W1 (read once)
                            + 4 * (2 * HIDDEN + 1)           # b1, w2, b2
                            + 4 * b_pad * LANES),            # f32 output slab
        ),
    )(xb, w1t, b1, w2, b2)
    return out[:B, :OUT_FEATURES]


# ----------------------------------------------------------------------------
# Folded (single-affine) kernel: out = x @ w_eff + b_eff  — the primary path.
# Purely HBM-bound on the x stream; kept f32 for fidelity.
# ----------------------------------------------------------------------------
def fcnet_fused_kernel(x_ref, w_ref, b_ref, o_ref):
    # x_ref: (tm, 1664) f32   w_ref: (1, 1664) f32   b_ref: (1,) f32 in SMEM
    # o_ref: (tm, 128) f32
    out = jnp.sum(x_ref[...] * w_ref[...], axis=-1, keepdims=True) + b_ref[0]
    o_ref[...] = jnp.broadcast_to(out, o_ref.shape).astype(o_ref.dtype)


def fold_params(params):
    """One-time algebraic fold (exact in real arithmetic): W_eff = W2 @ W1, b_eff = W2 @ b1 + b2."""
    fc1_w, fc1_b, fc2_w, fc2_b = params
    w_eff = (fc2_w @ fc1_w).reshape(1, IN_FEATURES).astype(jnp.float32)   # (1, 1664)
    b_eff = (fc2_w @ fc1_b + fc2_b).reshape(1).astype(jnp.float32)        # (1,)
    return w_eff, b_eff


def fcnet_forward_fused(x, folded_params, tm_max=TM_MAX_FUSED):
    w_eff, b_eff = folded_params
    B = x.shape[0]
    tm, num_tiles, b_pad = _tiling(B, tm_max, align=8)

    xf = x.astype(jnp.float32)
    if b_pad != B:
        xf = jnp.pad(xf, ((0, b_pad - B), (0, 0)))

    out = pl.pallas_call(
        fcnet_fused_kernel,
        out_shape=jax.ShapeDtypeStruct((b_pad, LANES), jnp.float32),
        grid_spec=pltpu.PrefetchScalarGridSpec(
            num_scalar_prefetch=0,
            grid=(num_tiles,),
            in_specs=[
                pl.BlockSpec((tm, IN_FEATURES), lambda i: (i, 0)),        # x: tiled over batch
                pl.BlockSpec((1, IN_FEATURES), lambda i: (0, 0),          # w_eff: resident row
                             pipeline_mode=pl.Buffered(1)),
                pl.BlockSpec(memory_space=pltpu.MemorySpace.SMEM),        # b_eff scalar
            ],
            out_specs=pl.BlockSpec((tm, LANES), lambda i: (i, 0)),
        ),
        compiler_params=pltpu.CompilerParams(
            dimension_semantics=("parallel",),
            vmem_limit_bytes=VMEM_LIMIT_BYTES,
        ),
        cost_estimate=pl.CostEstimate(
            flops=2 * b_pad * IN_FEATURES,
            transcendentals=0,
            bytes_accessed=4 * (b_pad * IN_FEATURES + IN_FEATURES + 1 + b_pad * LANES),
        ),
    )(xf, w_eff, b_eff)
    return out[:B, :OUT_FEATURES]


# ----------------------------------------------------------------------------
# Params / reference (PyTorch nn.Linear layout and init).
# ----------------------------------------------------------------------------
def init_params(key):
    """Mirror nn.Linear: weight (out, in), bias (out,), U(-1/sqrt(fan_in), 1/sqrt(fan_in))."""
    k1, k2, k3, k4 = jax.random.split(key, 4)
    bound1 = 1.0 / math.sqrt(IN_FEATURES)
    bound2 = 1.0 / math.sqrt(HIDDEN)
    fc1_w = jax.random.uniform(k1, (HIDDEN, IN_FEATURES), jnp.float32, -bound1, bound1)
    fc1_b = jax.random.uniform(k2, (HIDDEN,), jnp.float32, -bound1, bound1)
    fc2_w = jax.random.uniform(k3, (OUT_FEATURES, HIDDEN), jnp.float32, -bound2, bound2)
    fc2_b = jax.random.uniform(k4, (OUT_FEATURES,), jnp.float32, -bound2, bound2)
    return fc1_w, fc1_b, fc2_w, fc2_b


def reference_forward(x, params):
    fc1_w, fc1_b, fc2_w, fc2_b = params
    h = x @ fc1_w.T + fc1_b
    return h @ fc2_w.T + fc2_b


if __name__ == "__main__":
    key = jax.random.PRNGKey(0)
    kx1, kx2, kp = jax.random.split(key, 3)
    params = init_params(kp)
    folded = fold_params(params)

    # Small batch (as in the original script).
    B = 8
    x = jax.random.normal(kx1, (B, IN_FEATURES), jnp.float32)
    ref = reference_forward(x, params)

    # Primary (folded) path: f32, tight tolerance (reduction re-association only).
    out_fused = jax.block_until_ready(fcnet_forward_fused(x, folded))
    assert out_fused.shape == (B, OUT_FEATURES), out_fused.shape
    assert jnp.allclose(out_fused, ref, atol=5e-4, rtol=5e-4), (
        float(jnp.max(jnp.abs(out_fused - ref))))

    # Faithful path: bf16 MXU operands -> looser tolerance vs the f32 reference.
    out = jax.block_until_ready(fcnet_forward(x, params))
    assert out.shape == (B, OUT_FEATURES), out.shape
    assert jnp.allclose(out, ref, atol=3e-2, rtol=3e-2), (
        float(jnp.max(jnp.abs(out - ref))))

    # Ragged batch, multi-tile grid, and a non-aligned caller tm_max (forced to
    # the sublane alignment) -> exercises padding + the parallel batch axis.
    B2 = 40
    x2 = jax.random.normal(kx2, (B2, IN_FEATURES), jnp.float32)
    ref2 = reference_forward(x2, params)
    out2_fused = jax.block_until_ready(fcnet_forward_fused(x2, folded, tm_max=20))
    assert out2_fused.shape == (B2, OUT_FEATURES), out2_fused.shape
    assert jnp.allclose(out2_fused, ref2, atol=5e-4, rtol=5e-4)
    out2 = jax.block_until_ready(fcnet_forward(x2, params, tm_max=20))
    assert out2.shape == (B2, OUT_FEATURES), out2.shape
    assert jnp.allclose(out2, ref2, atol=3e-2, rtol=3e-2)

    print("KERNEL_OK")
</pallas_src>

<mosaic_0001>
module attributes {stable_mosaic.version = 11 : i64} {
  func.func @fcnet_fused_kernel(%arg0: i32, %arg1: memref<8x1664xf32, #tpu.memory_space<vmem>>, %arg2: memref<1x1664xf32, #tpu.memory_space<vmem>>, %arg3: memref<1xf32, #tpu.memory_space<smem>>, %arg4: memref<8x128xf32, #tpu.memory_space<vmem>>) attributes {dimension_semantics = [#tpu.dimension_semantics<parallel>], iteration_bounds = array<i64: 1>, scalar_prefetch = 0 : i64, scratch_operands = 0 : i64, tpu.core_type = #tpu.core_type<tc>, window_params = [{transform_indices = @transform_0, window_bounds = array<i64: 8, 1664>}, {pipeline_mode = #tpu.pipeline_mode<synchronous>, transform_indices = @transform_1, window_bounds = array<i64: 1, 1664>}, {transform_indices = @transform_2, window_bounds = array<i64: 1>}, {transform_indices = @transform_3, window_bounds = array<i64: 8, 128>}]} {
    %c0 = arith.constant 0 : index
    %c0_0 = arith.constant 0 : index
    %0 = vector.load %arg1[%c0, %c0_0] : memref<8x1664xf32, #tpu.memory_space<vmem>>, vector<8x1664xf32>
    %c0_1 = arith.constant 0 : index
    %c0_2 = arith.constant 0 : index
    %1 = vector.load %arg2[%c0_1, %c0_2] : memref<1x1664xf32, #tpu.memory_space<vmem>>, vector<1x1664xf32>
    %2 = vector.broadcast %1 : vector<1x1664xf32> to vector<8x1664xf32>
    %3 = arith.mulf %0, %2 : vector<8x1664xf32>
    %cst = arith.constant dense<0.000000e+00> : vector<8xf32>
    %4 = vector.multi_reduction <add>, %3, %cst [1] : vector<8x1664xf32> to vector<8xf32>
    %5 = vector.shape_cast %4 : vector<8xf32> to vector<8x1xf32>
    %c0_3 = arith.constant 0 : index
    %6 = memref.load %arg3[%c0_3] : memref<1xf32, #tpu.memory_space<smem>>
    %7 = vector.broadcast %6 : f32 to vector<8x1xf32>
    %8 = arith.addf %5, %7 : vector<8x1xf32>
    %9 = vector.shape_cast %8 : vector<8x1xf32> to vector<8x1xf32>
    %10 = vector.broadcast %9 : vector<8x1xf32> to vector<8x128xf32>
    %c0_4 = arith.constant 0 : index
    %c0_5 = arith.constant 0 : index
    %11 = vector.load %arg4[%c0_4, %c0_5] : memref<8x128xf32, #tpu.memory_space<vmem>>, vector<8x128xf32>
    tpu.vector_store %arg4[%c0_4, %c0_5], %10 {strides = array<i32>} : memref<8x128xf32, #tpu.memory_space<vmem>>, vector<8x128xf32>,
    return
  }
  func.func @transform_0(%arg0: i32) -> (i32, i32) {
    %c0_i32 = arith.constant 0 : i32
    %c0_i32_0 = arith.constant 0 : i32
    return %arg0, %c0_i32 : i32, i32
  }
  func.func @transform_1(%arg0: i32) -> (i32, i32) {
    %c0_i32 = arith.constant 0 : i32
    %c0_i32_0 = arith.constant 0 : i32
    %c0_i32_1 = arith.constant 0 : i32
    return %c0_i32, %c0_i32_0 : i32, i32
  }
  func.func @transform_2(%arg0: i32) -> i32 {
    %c0_i32 = arith.constant 0 : i32
    %c0_i32_0 = arith.constant 0 : i32
    return %c0_i32 : i32
  }
  func.func @transform_3(%arg0: i32) -> (i32, i32) {
    %c0_i32 = arith.constant 0 : i32
    %c0_i32_0 = arith.constant 0 : i32
    return %arg0, %c0_i32 : i32, i32
  }
}

</mosaic_0001>

<llo_original>
// kernel: tpu_custom_call.1
$region0: #{tpu_custom_call.1}
  #allocation0 [shape = 'u32[]', space=smem, size = 0x4, offset = 0x4, fixed_abs, tag = 'smem constant byte address 0x4 - core index']
  #allocation1 [shape = 'u32[144,128]{1,0:T(1,128)}', space=vmem, size = 0x12000, scoped, tag = 'internal scratch']
  #allocation2 [shape = 'f32[1]{0:T(128)S(6)}', space=smem, size = 0x200, scoped, tag = 'scoped memory for tpu_custom_call.1']
  %s0 = inlined_call_operand.hbm [shape: f32[8,1664], index: 0, kind: input, shape index: {}]
  %s1 = inlined_call_operand.hbm [shape: f32[1,1664], index: 1, kind: input, shape index: {}]
  %s2 = inlined_call_operand.<no memory space> [shape: f32[1], index: 2, kind: input, shape index: {}]
  %s3 = inlined_call_operand.hbm [shape: f32[8,128], index: 3, kind: output, shape index: {}]
  %s4 = sld [smem:[#allocation0]]
  $region30: #{tpu_custom_call.1} parent=0
    _
  %s6 = ssub.s32 1, %s4
  %s7 = scalar_select 0, %s6, %s4
  %8 = sst [smem:[#allocation2]] %s2
  $region1: #{tpu_custom_call.1} parent=0
    #allocation3 [shape = 'u8[53248]{0}', space=vmem, size = 0xd000, scoped, tag = 'input window, operand 0, single buffered']
    #allocation4 [shape = 's32[1]{0}', space=sflag, size = 0x4, scoped, tag = 'scoped memory for tpu_custom_call.1']
    #allocation5 [shape = 's32[1]{0}', space=sflag, size = 0x4, scoped, tag = 'scoped memory for tpu_custom_call.1']
    #allocation6 [shape = 'u8[6656]{0}', space=vmem, size = 0x1c00, scoped, tag = 'input window, operand 1, single buffered']
    #allocation7 [shape = 's32[1]{0}', space=sflag, size = 0x4, scoped, tag = 'scoped memory for tpu_custom_call.1']
    #allocation8 [shape = 'u8[4096]{0}', space=vmem, size = 0x1000, scoped, tag = 'output window, operand 0, single buffered']
    %9 = vsyncpa [#allocation4], 0
    %10 = vsyncpa [#allocation7], 0
    %11 = vsyncpa [#allocation5], 0
    // Predicated region
    $region2: #{tpu_custom_call.1} parent=1 // pred_check
      _
    $region3: #{tpu_custom_call.1} parent=1 // pred_check_branch
      %13 = sbr.rel (0) target = $region5
    $region4: #{tpu_custom_call.1} parent=1 // pred_region
      %s15 = ssub.s32 1664, 1664
      %16 = vsyncadd [#allocation4], %s15
      %s18 = sshll.u32 [#allocation3], 4
      %s19 = int_to_ptr.vmem [resolvable:$true] %s18
      %21 = dma.hbm_to_vmem [thread:$0]  %s0, 1664, %s19, [#allocation4]
    $region5: #{tpu_custom_call.1} parent=1 // pred_fallthru
      _
    // Predicated region
    $region6: #{tpu_custom_call.1} parent=1 // pred_check
      _
    $region7: #{tpu_custom_call.1} parent=1 // pred_check_branch
      %23 = sbr.rel (0) target = $region9
    $region8: #{tpu_custom_call.1} parent=1 // pred_region
      %s25 = ssub.s32 208, 208
      %26 = vsyncadd [#allocation7], %s25
      %s28 = sshll.u32 [#allocation6], 4
      %s29 = int_to_ptr.vmem [resolvable:$true] %s28
      %31 = dma.hbm_to_vmem [thread:$0]  %s1, 208, %s29, [#allocation7]
    $region9: #{tpu_custom_call.1} parent=1 // pred_fallthru
      _
    // Predicated region
    $region10: #{tpu_custom_call.1} parent=1 // pred_check
      _
    $region11: #{tpu_custom_call.1} parent=1 // pred_check_branch
      %33 = sbr.rel (0) target = $region13
    $region12: #{tpu_custom_call.1} parent=1 // pred_region
      _
    $region13: #{tpu_custom_call.1} parent=1 // pred_fallthru
      _
    // Predicated region
    $region14: #{tpu_custom_call.1} parent=1 // pred_check
      _
    $region15: #{tpu_custom_call.1} parent=1 // pred_check_branch
      %35 = sbr.rel (0) target = $region17
    $region16: #{tpu_custom_call.1} parent=1 // pred_region
      %36 = dma.done [#allocation4], 1664
    $region17: #{tpu_custom_call.1} parent=1 // pred_fallthru
      _
    // Predicated region
    $region18: #{tpu_custom_call.1} parent=1 // pred_check
      _
    $region19: #{tpu_custom_call.1} parent=1 // pred_check_branch
      %38 = sbr.rel (0) target = $region21
    $region20: #{tpu_custom_call.1} parent=1 // pred_region
      %39 = dma.done [#allocation7], 208
    $region21: #{tpu_custom_call.1} parent=1 // pred_fallthru
      _
    %v40 = vld [vmem:[#allocation3] sm:$0xff]
    %v41 = vld [vmem:[#allocation3 + $0x8] sm:$0xff]
    %v42 = vld [vmem:[#allocation3 + $0x10] sm:$0xff]
    %v43 = vld [vmem:[#allocation3 + $0x18] sm:$0xff]
    %v44 = vld [vmem:[#allocation3 + $0x20] sm:$0xff]
    %v45 = vld [vmem:[#allocation3 + $0x28] sm:$0xff]
    %v46 = vld [vmem:[#allocation3 + $0x30] sm:$0xff]
    %v47 = vld [vmem:[#allocation3 + $0x38] sm:$0xff]
    %v48 = vld [vmem:[#allocation3 + $0x40] sm:$0xff]
    %v49 = vld [vmem:[#allocation3 + $0x48] sm:$0xff]
    %v50 = vld [vmem:[#allocation3 + $0x50] sm:$0xff]
    %v51 = vld [vmem:[#allocation3 + $0x58] sm:$0xff]
    %v52 = vld [vmem:[#allocation3 + $0x60] sm:$0xff]
    %v53 = vld [vmem:[#allocation6] sm:$0xff]
    %v54 = vld [vmem:[#allocation6 + $0x8] sm:$0x1f]
    %v57 = vlaneseq
    %v58 = vshrl.u32 %v57, 7
    %v59 = vsub.s32 0, %v58
    %v60 = vrot.slane %v53, %v59
    %v61 = vlaneseq
    %v62 = vshrl.u32 %v61, 7
    %v63 = vsub.s32 1, %v62
    %v64 = vrot.slane %v53, %v63
    %v65 = vlaneseq
    %v66 = vshrl.u32 %v65, 7
    %v67 = vsub.s32 2, %v66
    %v68 = vrot.slane %v53, %v67
    %v69 = vlaneseq
    %v70 = vshrl.u32 %v69, 7
    %v71 = vsub.s32 3, %v70
    %v72 = vrot.slane %v53, %v71
    %v73 = vlaneseq
    %v74 = vshrl.u32 %v73, 7
    %v75 = vsub.s32 4, %v74
    %v76 = vrot.slane %v53, %v75
    %v77 = vlaneseq
    %v78 = vshrl.u32 %v77, 7
    %v79 = vsub.s32 5, %v78
    %v80 = vrot.slane %v53, %v79
    %v81 = vlaneseq
    %v82 = vshrl.u32 %v81, 7
    %v83 = vsub.s32 6, %v82
    %v84 = vrot.slane %v53, %v83
    %v85 = vlaneseq
    %v86 = vshrl.u32 %v85, 7
    %v87 = vsub.s32 7, %v86
    %v88 = vrot.slane %v53, %v87
    %v89 = vlaneseq
    %v90 = vshrl.u32 %v89, 7
    %v91 = vsub.s32 0, %v90
    %v92 = vrot.slane %v54, %v91
    %v93 = vlaneseq
    %v94 = vshrl.u32 %v93, 7
    %v95 = vsub.s32 1, %v94
    %v96 = vrot.slane %v54, %v95
    %v97 = vlaneseq
    %v98 = vshrl.u32 %v97, 7
    %v99 = vsub.s32 2, %v98
    %v100 = vrot.slane %v54, %v99
    %v101 = vlaneseq
    %v102 = vshrl.u32 %v101, 7
    %v103 = vsub.s32 3, %v102
    %v104 = vrot.slane %v54, %v103
    %v105 = vlaneseq
    %v106 = vshrl.u32 %v105, 7
    %v107 = vsub.s32 4, %v106
    %v108 = vrot.slane %v54, %v107
    %v122 = vmul.f32 %v40, %v60
    %v123 = vmul.f32 %v41, %v64
    %v124 = vmul.f32 %v42, %v68
    %v125 = vmul.f32 %v43, %v72
    %v126 = vmul.f32 %v44, %v76
    %v127 = vmul.f32 %v45, %v80
    %v128 = vmul.f32 %v46, %v84
    %v129 = vmul.f32 %v47, %v88
    %v130 = vmul.f32 %v48, %v92
    %v131 = vmul.f32 %v49, %v96
    %v132 = vmul.f32 %v50, %v100
    %v133 = vmul.f32 %v51, %v104
    %v134 = vmul.f32 %v52, %v108
    %v135 = vadd.f32 %v122, %v123
    %v136 = vadd.f32 %v135, %v124
    %v137 = vadd.f32 %v136, %v125
    %v138 = vadd.f32 %v137, %v126
    %v139 = vadd.f32 %v138, %v127
    %v140 = vadd.f32 %v139, %v128
    %v141 = vadd.f32 %v140, %v129
    %v142 = vadd.f32 %v141, %v130
    %v143 = vadd.f32 %v142, %v131
    %v144 = vadd.f32 %v143, %v132
    %v145 = vadd.f32 %v144, %v133
    %v146 = vadd.f32 %v145, %v134
    %147 = vadd.xlane.f32.xlu0 %v146
    %v148 = vpop.xlane.xlu0 %147
    %s149 = sld [smem:[#allocation2]]
    %v150 = vstv %s149
    %v151 = vadd.f32 %v148, %v150
    %152 = vst [vmem:[#allocation8] sm:$0xff] %v151
    // Predicated region
    $region22: #{tpu_custom_call.1} parent=1 // pred_check
      _
    $region23: #{tpu_custom_call.1} parent=1 // pred_check_branch
      %154 = sbr.rel (0) target = $region25
    $region24: #{tpu_custom_call.1} parent=1 // pred_region
      %s156 = ssub.s32 128, 128
      %157 = vsyncadd [#allocation5], %s156
      %s159 = sshll.u32 [#allocation8], 4
      %s160 = int_to_ptr.vmem [resolvable:$true] %s159
      %162 = dma.vmem_to_hbm [thread:$0]  %s160, 128, %s3, [#allocation5]
    $region25: #{tpu_custom_call.1} parent=1 // pred_fallthru
      _
    // Predicated region
    $region26: #{tpu_custom_call.1} parent=1 // pred_check
      _
    $region27: #{tpu_custom_call.1} parent=1 // pred_check_branch
      %164 = sbr.rel (0) target = $region29
    $region28: #{tpu_custom_call.1} parent=1 // pred_region
      %165 = dma.done [#allocation5], 128
    $region29: #{tpu_custom_call.1} parent=1 // pred_fallthru
      _
    %166 = vsyncpa [#allocation4], 1
    %167 = vsyncpa [#allocation7], 1
    %168 = vsyncpa [#allocation5], 1

</llo_original>
